<compile_context>
chip_gen: v5e
topology: v5e:2x2
jax: 0.10.0
libtpu: 0.0.40
codegen_flags: <defaults>
</compile_context>

<pallas_src>
import numpy as np
import jax
import jax.numpy as jnp
from jax.experimental import pallas as pl
from jax.experimental.pallas import tpu as pltpu

# ---------------------------------------------------------------------------
# Constants matching kornia.filters.bilateral_blur(kernel_size=(3,3),
# sigma_color=10.0, sigma_space=(1.0, 1.0), border_type='reflect').
# ---------------------------------------------------------------------------
_SIGMA_COLOR = 10.0
_COLOR_COEF = -0.5 / (_SIGMA_COLOR ** 2)
_g1 = np.exp(-0.5 * np.array([-1.0, 0.0, 1.0]) ** 2 / (1.0 ** 2))
_g1 = _g1 / _g1.sum()
_SPACE_K = np.outer(_g1, _g1)          # kornia get_gaussian_kernel2d((3,3), (1,1))

# Order of the 8 non-center taps; must match build_space_row().
_TAP_OFFSETS = ((-1, -1), (-1, 0), (-1, 1),
                (0, -1),           (0, 1),
                (1, -1),  (1, 0),  (1, 1))


# ---------------------------------------------------------------------------
# Fused kernel: sigmoid -> reflect-neighbor bilateral blur (lane-packed) -> mask
#               -> (Radon ∘ sinogram-filter) contraction.  Everything stays in vregs.
# One grid step == one image; operator / mask / space weights stay resident.
# ---------------------------------------------------------------------------
def fused_forward_kernel(x_ref, mask_ref, space_ref, a3_ref, y_ref, s_ref):
    dim = mask_ref.shape[0]

    # --- sigmoid (EUP) ------------------------------------------------------
    sp = jax.nn.sigmoid(x_ref[...])                      # (dim, dim) f32

    # --- reflect-shifted neighbors, built as values (no padded scratch) -----
    row_p = jnp.concatenate([sp[1:, :], sp[dim - 2:dim - 1, :]], axis=0)   # sp[i+1, j]
    row_m = jnp.concatenate([sp[1:2, :], sp[:dim - 1, :]], axis=0)         # sp[i-1, j]

    def col_p(v):  # v[i, j+1] with reflect
        return jnp.concatenate([v[:, 1:], v[:, dim - 2:dim - 1]], axis=1)

    def col_m(v):  # v[i, j-1] with reflect
        return jnp.concatenate([v[:, 1:2], v[:, :dim - 1]], axis=1)

    rows = {-1: row_m, 0: sp, 1: row_p}
    taps = []
    for oy, ox in _TAP_OFFSETS:
        base = rows[oy]
        taps.append(base if ox == 0 else (col_p(base) if ox == 1 else col_m(base)))

    # --- lane-dense packing: (dim, 8*dim) slab = (16, 128) at dim=16 ---------
    slab = jnp.concatenate(taps, axis=1)                  # 8 taps side by side
    sp8 = jnp.concatenate([sp] * 8, axis=1)
    diff = slab - sp8
    w = space_ref[...] * jnp.exp(_COLOR_COEF * (diff * diff))   # (dim, 8*dim)
    num_slab = w * slab

    def group8_sum(v):
        # Sum the 8 lane-groups of width `dim` with 3 roll-adds (XLU slot).
        v = v + pltpu.roll(v, 4 * dim, axis=1)
        v = v + pltpu.roll(v, 2 * dim, axis=1)
        v = v + pltpu.roll(v, dim, axis=1)
        return v[:, :dim]

    w_c = float(_SPACE_K[1, 1])
    num = group8_sum(num_slab) + w_c * sp                 # center tap: diff==0, skip exp
    den = group8_sum(w) + w_c

    # EUP approx reciprocal + one Newton step (removes the ~1e-3 approx error cheaply).
    r = pl.reciprocal(den, approx=True)
    r = r * (2.0 - den * r)
    y = mask_ref[...] * (num * r)
    y_ref[...] = y                                        # output 1: (dim, dim)

    # --- fused Radon + sinogram filter: per-row batched MXU contraction -----
    # s[n] = sum_{i,j} y[i,j] * A3[i,j,n]; contract j per row on the MXU, then sum rows.
    part = jnp.einsum('bqd,bdn->bqn', y[:, None, :], a3_ref[...],
                      preferred_element_type=jnp.float32)  # (dim, 1, n_out)
    s_ref[...] = jnp.sum(part, axis=0)                     # (1, n_out) lane-dense


# ---------------------------------------------------------------------------
# Operator construction (one-time, outside the kernel).
# ---------------------------------------------------------------------------
def build_radon_matrix(dim, angles):
    """Pixel-driven parallel-beam Radon operator, (n_angles*dim, dim*dim)."""
    # TODO(synk): torch_radon integrates along rays; this pixel-driven linear-interp
    # projection matrix is an equivalent-structure approximation of Radon.forward.
    n_ang = angles.shape[0]
    center = (dim - 1) / 2.0
    ii, jj = jnp.meshgrid(jnp.arange(dim), jnp.arange(dim), indexing="ij")
    x = jj.astype(jnp.float32) - center
    y = center - ii.astype(jnp.float32)
    cos = jnp.cos(angles)[:, None, None]
    sin = jnp.sin(angles)[:, None, None]
    t = cos * x[None] + sin * y[None] + center           # detector coord per pixel
    t0 = jnp.floor(t)
    w1 = t - t0
    k = jnp.arange(dim, dtype=jnp.float32)
    A = ((k[None, :, None, None] == t0[:, None, :, :]) * (1.0 - w1)[:, None, :, :]
         + (k[None, :, None, None] == (t0 + 1.0)[:, None, :, :]) * w1[:, None, :, :])
    return A.reshape(n_ang * dim, dim * dim).astype(jnp.float32)


def build_filter_matrix(proj_dim, a):
    """Real (N,N) matrix F so that filtered_col = F @ sino_col (circular FFT filter, a!=0)."""
    # TODO(synk): verify fftshift/frequency ordering against the reference filter_sinogram.
    N = proj_dim
    step = 2.0 * np.pi / N
    w = np.arange(-np.pi, np.pi, step)
    aw2 = a * w / 2.0
    rn1 = np.abs(2.0 / a * np.sin(aw2))
    safe = np.where(aw2 == 0.0, 1.0, aw2)
    rn2 = np.where(aw2 == 0.0, 1.0, np.sin(aw2) / safe)  # sinc limit at w=0
    r = rn1 * rn2 ** 2
    filt = np.fft.fftshift(r)
    F = np.fft.fft(np.eye(N), axis=0)
    Fmat = np.real(np.fft.ifft(filt[:, None] * F, axis=0))
    return Fmat.astype(np.float32)


def build_combined_operator(dim, angles, a):
    """A3[i,j,n] = (A^T @ kron(I_n_angles, F^T))[i*dim+j, n]: Radon + per-angle filter folded."""
    n_ang = int(angles.shape[0])
    A = build_radon_matrix(dim, angles)                        # (n_ang*dim, dim*dim)
    Fmat = build_filter_matrix(dim, a)                         # (dim, dim), acts on columns
    K = np.kron(np.eye(n_ang, dtype=np.float32), Fmat.T)       # (n_ang*dim, n_ang*dim)
    A_comb_T = jnp.asarray(A).T @ jnp.asarray(K, dtype=jnp.float32)   # (dim*dim, n_ang*dim)
    # Kept in f32 (s_hat accuracy); at realistic CT sizes cast to bf16 for MXU throughput.
    return A_comb_T.reshape(dim, dim, n_ang * dim).astype(jnp.float32)


def build_space_row(dim):
    """(1, 8*dim) lane-constant spatial Gaussian weights, one group of `dim` lanes per tap."""
    groups = [np.full((dim,), _SPACE_K[oy + 1, ox + 1], dtype=np.float32)
              for (oy, ox) in _TAP_OFFSETS]
    return jnp.asarray(np.concatenate(groups).reshape(1, 8 * dim))


# ---------------------------------------------------------------------------
# Forward wrappers.  The original forward(s) ignores its input `s`.
# ---------------------------------------------------------------------------
def no_model_forward_batched(y_hat_params, image_mask, space_row, a3):
    """Batched forward: (B, dim, dim) -> ((B, dim, dim), (B, n_angles, dim))."""
    B, dim, _ = y_hat_params.shape
    n_out = a3.shape[-1]
    n_angles = n_out // dim

    y, s = pl.pallas_call(
        fused_forward_kernel,
        out_shape=(jax.ShapeDtypeStruct((B, dim, dim), jnp.float32),
                   jax.ShapeDtypeStruct((B, 1, n_out), jnp.float32)),
        grid=(B,),
        in_specs=[
            pl.BlockSpec((None, dim, dim), lambda b: (b, 0, 0)),     # per-image params
            pl.BlockSpec((dim, dim), lambda b: (0, 0)),              # mask (resident)
            pl.BlockSpec((1, 8 * dim), lambda b: (0, 0)),            # space weights (resident)
            pl.BlockSpec((dim, dim, n_out), lambda b: (0, 0, 0)),    # Radon+filter op (resident)
        ],
        out_specs=(
            pl.BlockSpec((None, dim, dim), lambda b: (b, 0, 0)),
            pl.BlockSpec((None, 1, n_out), lambda b: (b, 0, 0)),     # lane-dense sinogram slab
        ),
        compiler_params=pltpu.CompilerParams(
            dimension_semantics=("parallel",)),                      # shards batch on v7x TCs
        # At realistic CT sizes (dim 256-512, 180 angles) the operator must stream from HBM
        # with (i,n)-tiled BlockSpecs sized for the per-generation VMEM (v7x: 64 MiB) and an
        # explicit vmem_limit_bytes; at dim=16 it is a 128 KiB resident block.
    )(y_hat_params, image_mask, space_row, a3)

    return y, s.reshape(B, n_angles, dim)


def no_model_forward(y_hat_param, image_mask, space_row, a3):
    """Single-image forward matching NoModel.forward: returns (y_hat, s_hat)."""
    y, s = no_model_forward_batched(y_hat_param[None], image_mask, space_row, a3)
    return y[0], s[0]


if __name__ == "__main__":
    key = jax.random.PRNGKey(0)
    k_single, k_batch = jax.random.split(key)

    dim = 16                      # proj_dim (and output image side)
    n_angles = 8                  # 1-degree steps (radians), per _set_step_size_angle
    angles = np.deg2rad(np.arange(n_angles, dtype=np.float64))

    # Deterministic "parameters" (module init uses image_mask for y_hat; we use a
    # random init for a non-trivial exercise of the kernel).
    y_hat_param = jax.random.normal(k_single, (dim, dim), dtype=jnp.float32)
    image_mask = jnp.ones((dim, dim), dtype=jnp.float32)

    a3 = build_combined_operator(dim, jnp.asarray(angles, dtype=jnp.float32), a=0.1)
    space_row = build_space_row(dim)

    # Single-image forward (module semantics).
    fwd = jax.jit(no_model_forward)
    y_img, s_hat = fwd(y_hat_param, image_mask, space_row, a3)
    jax.block_until_ready((y_img, s_hat))
    assert y_img.shape == (dim, dim)
    assert s_hat.shape == (n_angles, dim)
    assert bool(jnp.all(jnp.isfinite(y_img))) and bool(jnp.all(jnp.isfinite(s_hat)))

    # Batched forward (amortizes launch latency across optimization iterations / images).
    batch = 4
    y_hat_batch = jax.random.normal(k_batch, (batch, dim, dim), dtype=jnp.float32)
    fwd_b = jax.jit(no_model_forward_batched)
    y_b, s_b = fwd_b(y_hat_batch, image_mask, space_row, a3)
    jax.block_until_ready((y_b, s_b))
    assert y_b.shape == (batch, dim, dim)
    assert s_b.shape == (batch, n_angles, dim)
    assert bool(jnp.all(jnp.isfinite(y_b))) and bool(jnp.all(jnp.isfinite(s_b)))

    print("KERNEL_OK")
</pallas_src>

<mosaic_0001>
module attributes {stable_mosaic.version = 11 : i64} {
  func.func @fused_forward_kernel(%arg0: i32, %arg1: memref<1x16x16xf32, #tpu.memory_space<vmem>>, %arg2: memref<16x16xf32, #tpu.memory_space<vmem>>, %arg3: memref<1x128xf32, #tpu.memory_space<vmem>>, %arg4: memref<16x16x128xf32, #tpu.memory_space<vmem>>, %arg5: memref<1x16x16xf32, #tpu.memory_space<vmem>>, %arg6: memref<1x1x128xf32, #tpu.memory_space<vmem>>) attributes {dimension_semantics = [#tpu.dimension_semantics<parallel>], iteration_bounds = array<i64: 1>, scalar_prefetch = 0 : i64, scratch_operands = 0 : i64, tpu.core_type = #tpu.core_type<tc>, window_params = [{transform_indices = @transform_0, window_bounds = array<i64: 1, 16, 16>}, {pipeline_mode = #tpu.pipeline_mode<synchronous>, transform_indices = @transform_1, window_bounds = array<i64: 16, 16>}, {pipeline_mode = #tpu.pipeline_mode<synchronous>, transform_indices = @transform_2, window_bounds = array<i64: 1, 128>}, {pipeline_mode = #tpu.pipeline_mode<synchronous>, transform_indices = @transform_3, window_bounds = array<i64: 16, 16, 128>}, {transform_indices = @transform_4, window_bounds = array<i64: 1, 16, 16>}, {transform_indices = @transform_5, window_bounds = array<i64: 1, 1, 128>}]} {
    %c0 = arith.constant 0 : index
    %c0_0 = arith.constant 0 : index
    %c0_1 = arith.constant 0 : index
    %0 = vector.load %arg1[%c0, %c0_0, %c0_1] : memref<1x16x16xf32, #tpu.memory_space<vmem>>, vector<1x16x16xf32>
    %1 = vector.shape_cast %0 : vector<1x16x16xf32> to vector<16x16xf32>
    %2 = arith.negf %1 : vector<16x16xf32>
    %3 = math.exp %2 : vector<16x16xf32>
    %cst = arith.constant 1.000000e+00 : f32
    %4 = vector.broadcast %cst : f32 to vector<16x16xf32>
    %5 = arith.addf %4, %3 : vector<16x16xf32>
    %6 = arith.divf %4, %5 : vector<16x16xf32>
    %7 = vector.extract_strided_slice %6 {offsets = [1, 0], sizes = [15, 16], strides = [1, 1]} : vector<16x16xf32> to vector<15x16xf32>
    %8 = vector.extract_strided_slice %6 {offsets = [14, 0], sizes = [1, 16], strides = [1, 1]} : vector<16x16xf32> to vector<1x16xf32>
    %9 = tpu.concatenate %7, %8 in 0 : vector<15x16xf32>, vector<1x16xf32> -> vector<16x16xf32>
    %10 = vector.extract_strided_slice %6 {offsets = [1, 0], sizes = [1, 16], strides = [1, 1]} : vector<16x16xf32> to vector<1x16xf32>
    %11 = vector.extract_strided_slice %6 {offsets = [0, 0], sizes = [15, 16], strides = [1, 1]} : vector<16x16xf32> to vector<15x16xf32>
    %12 = tpu.concatenate %10, %11 in 0 : vector<1x16xf32>, vector<15x16xf32> -> vector<16x16xf32>
    %13 = vector.extract_strided_slice %12 {offsets = [0, 1], sizes = [16, 1], strides = [1, 1]} : vector<16x16xf32> to vector<16x1xf32>
    %14 = vector.extract_strided_slice %12 {offsets = [0, 0], sizes = [16, 15], strides = [1, 1]} : vector<16x16xf32> to vector<16x15xf32>
    %15 = tpu.concatenate %13, %14 in 1 : vector<16x1xf32>, vector<16x15xf32> -> vector<16x16xf32>
    %16 = vector.extract_strided_slice %12 {offsets = [0, 1], sizes = [16, 15], strides = [1, 1]} : vector<16x16xf32> to vector<16x15xf32>
    %17 = vector.extract_strided_slice %12 {offsets = [0, 14], sizes = [16, 1], strides = [1, 1]} : vector<16x16xf32> to vector<16x1xf32>
    %18 = tpu.concatenate %16, %17 in 1 : vector<16x15xf32>, vector<16x1xf32> -> vector<16x16xf32>
    %19 = vector.extract_strided_slice %6 {offsets = [0, 1], sizes = [16, 1], strides = [1, 1]} : vector<16x16xf32> to vector<16x1xf32>
    %20 = vector.extract_strided_slice %6 {offsets = [0, 0], sizes = [16, 15], strides = [1, 1]} : vector<16x16xf32> to vector<16x15xf32>
    %21 = tpu.concatenate %19, %20 in 1 : vector<16x1xf32>, vector<16x15xf32> -> vector<16x16xf32>
    %22 = vector.extract_strided_slice %6 {offsets = [0, 1], sizes = [16, 15], strides = [1, 1]} : vector<16x16xf32> to vector<16x15xf32>
    %23 = vector.extract_strided_slice %6 {offsets = [0, 14], sizes = [16, 1], strides = [1, 1]} : vector<16x16xf32> to vector<16x1xf32>
    %24 = tpu.concatenate %22, %23 in 1 : vector<16x15xf32>, vector<16x1xf32> -> vector<16x16xf32>
    %25 = vector.extract_strided_slice %9 {offsets = [0, 1], sizes = [16, 1], strides = [1, 1]} : vector<16x16xf32> to vector<16x1xf32>
    %26 = vector.extract_strided_slice %9 {offsets = [0, 0], sizes = [16, 15], strides = [1, 1]} : vector<16x16xf32> to vector<16x15xf32>
    %27 = tpu.concatenate %25, %26 in 1 : vector<16x1xf32>, vector<16x15xf32> -> vector<16x16xf32>
    %28 = vector.extract_strided_slice %9 {offsets = [0, 1], sizes = [16, 15], strides = [1, 1]} : vector<16x16xf32> to vector<16x15xf32>
    %29 = vector.extract_strided_slice %9 {offsets = [0, 14], sizes = [16, 1], strides = [1, 1]} : vector<16x16xf32> to vector<16x1xf32>
    %30 = tpu.concatenate %28, %29 in 1 : vector<16x15xf32>, vector<16x1xf32> -> vector<16x16xf32>
    %31 = tpu.concatenate %15, %12, %18, %21, %24, %27, %9, %30 in 1 : vector<16x16xf32>, vector<16x16xf32>, vector<16x16xf32>, vector<16x16xf32>, vector<16x16xf32>, vector<16x16xf32>, vector<16x16xf32>, vector<16x16xf32> -> vector<16x128xf32>
    %32 = tpu.concatenate %6, %6, %6, %6, %6, %6, %6, %6 in 1 : vector<16x16xf32>, vector<16x16xf32>, vector<16x16xf32>, vector<16x16xf32>, vector<16x16xf32>, vector<16x16xf32>, vector<16x16xf32>, vector<16x16xf32> -> vector<16x128xf32>
    %33 = arith.subf %31, %32 : vector<16x128xf32>
    %c0_2 = arith.constant 0 : index
    %c0_3 = arith.constant 0 : index
    %34 = vector.load %arg3[%c0_2, %c0_3] : memref<1x128xf32, #tpu.memory_space<vmem>>, vector<1x128xf32>
    %35 = arith.mulf %33, %33 : vector<16x128xf32>
    %cst_4 = arith.constant -5.000000e-03 : f32
    %36 = vector.broadcast %cst_4 : f32 to vector<16x128xf32>
    %37 = arith.mulf %36, %35 : vector<16x128xf32>
    %38 = math.exp %37 : vector<16x128xf32>
    %39 = vector.broadcast %34 : vector<1x128xf32> to vector<16x128xf32>
    %40 = arith.mulf %39, %38 : vector<16x128xf32>
    %41 = arith.mulf %40, %31 : vector<16x128xf32>
    %c64_i32 = arith.constant 64 : i32
    %42 = tpu.dynamic_rotate %41 by %c64_i32 dim 1 : vector<16x128xf32>, i32 -> vector<16x128xf32>
    %43 = arith.addf %41, %42 : vector<16x128xf32>
    %c32_i32 = arith.constant 32 : i32
    %44 = tpu.dynamic_rotate %43 by %c32_i32 dim 1 : vector<16x128xf32>, i32 -> vector<16x128xf32>
    %45 = arith.addf %43, %44 : vector<16x128xf32>
    %c16_i32 = arith.constant 16 : i32
    %46 = tpu.dynamic_rotate %45 by %c16_i32 dim 1 : vector<16x128xf32>, i32 -> vector<16x128xf32>
    %47 = arith.addf %45, %46 : vector<16x128xf32>
    %48 = vector.extract_strided_slice %47 {offsets = [0, 0], sizes = [16, 16], strides = [1, 1]} : vector<16x128xf32> to vector<16x16xf32>
    %cst_5 = arith.constant 0.204179958 : f32
    %49 = vector.broadcast %cst_5 : f32 to vector<16x16xf32>
    %50 = arith.mulf %49, %6 : vector<16x16xf32>
    %51 = arith.addf %48, %50 : vector<16x16xf32>
    %c64_i32_6 = arith.constant 64 : i32
    %52 = tpu.dynamic_rotate %40 by %c64_i32_6 dim 1 : vector<16x128xf32>, i32 -> vector<16x128xf32>
    %53 = arith.addf %40, %52 : vector<16x128xf32>
    %c32_i32_7 = arith.constant 32 : i32
    %54 = tpu.dynamic_rotate %53 by %c32_i32_7 dim 1 : vector<16x128xf32>, i32 -> vector<16x128xf32>
    %55 = arith.addf %53, %54 : vector<16x128xf32>
    %c16_i32_8 = arith.constant 16 : i32
    %56 = tpu.dynamic_rotate %55 by %c16_i32_8 dim 1 : vector<16x128xf32>, i32 -> vector<16x128xf32>
    %57 = arith.addf %55, %56 : vector<16x128xf32>
    %58 = vector.extract_strided_slice %57 {offsets = [0, 0], sizes = [16, 16], strides = [1, 1]} : vector<16x128xf32> to vector<16x16xf32>
    %cst_9 = arith.constant 0.204179958 : f32
    %59 = vector.broadcast %cst_9 : f32 to vector<16x16xf32>
    %60 = arith.addf %58, %59 : vector<16x16xf32>
    %61 = tpu.reciprocal %60 {approx = true} : vector<16x16xf32> -> vector<16x16xf32>
    %62 = arith.mulf %60, %61 : vector<16x16xf32>
    %cst_10 = arith.constant 2.000000e+00 : f32
    %63 = vector.broadcast %cst_10 : f32 to vector<16x16xf32>
    %64 = arith.subf %63, %62 : vector<16x16xf32>
    %65 = arith.mulf %61, %64 : vector<16x16xf32>
    %c0_11 = arith.constant 0 : index
    %c0_12 = arith.constant 0 : index
    %66 = vector.load %arg2[%c0_11, %c0_12] : memref<16x16xf32, #tpu.memory_space<vmem>>, vector<16x16xf32>
    %67 = arith.mulf %51, %65 : vector<16x16xf32>
    %68 = arith.mulf %66, %67 : vector<16x16xf32>
    %c0_13 = arith.constant 0 : index
    %c0_14 = arith.constant 0 : index
    %c0_15 = arith.constant 0 : index
    %69 = vector.load %arg5[%c0_13, %c0_14, %c0_15] : memref<1x16x16xf32, #tpu.memory_space<vmem>>, vector<1x16x16xf32>
    %70 = vector.shape_cast %69 : vector<1x16x16xf32> to vector<16x16xf32>
    %71 = vector.shape_cast %68 : vector<16x16xf32> to vector<1x16x16xf32>
    tpu.vector_store %arg5[%c0_13, %c0_14, %c0_15], %71 {strides = array<i32>} : memref<1x16x16xf32, #tpu.memory_space<vmem>>, vector<1x16x16xf32>,
    %72 = vector.shape_cast %68 : vector<16x16xf32> to vector<16x1x16xf32>
    %c0_16 = arith.constant 0 : index
    %c0_17 = arith.constant 0 : index
    %c0_18 = arith.constant 0 : index
    %73 = vector.load %arg4[%c0_16, %c0_17, %c0_18] : memref<16x16x128xf32, #tpu.memory_space<vmem>>, vector<16x16x128xf32>
    "tpu.trace_start"() <{level = 10 : i32, message = "bqd,bdn->bqn"}> : () -> ()
    %cst_19 = arith.constant dense<0.000000e+00> : vector<16x1x128xf32>
    %74 = tpu.matmul %72, %73, %cst_19 {dimension_numbers = #tpu.dot_dimension_numbers<[2], [1], [1], [2], [0, 0, 0, 1, 1, 2], [0], [0]>} : vector<16x1x16xf32>, vector<16x16x128xf32>, vector<16x1x128xf32> -> vector<16x1x128xf32>
    "tpu.trace_stop"() : () -> ()
    %cst_20 = arith.constant dense<0.000000e+00> : vector<1x128xf32>
    %75 = vector.multi_reduction <add>, %74, %cst_20 [0] : vector<16x1x128xf32> to vector<1x128xf32>
    %c0_21 = arith.constant 0 : index
    %c0_22 = arith.constant 0 : index
    %c0_23 = arith.constant 0 : index
    %76 = vector.load %arg6[%c0_21, %c0_22, %c0_23] : memref<1x1x128xf32, #tpu.memory_space<vmem>>, vector<1x1x128xf32>
    %77 = vector.shape_cast %76 : vector<1x1x128xf32> to vector<1x128xf32>
    %78 = vector.shape_cast %75 : vector<1x128xf32> to vector<1x1x128xf32>
    tpu.vector_store %arg6[%c0_21, %c0_22, %c0_23], %78 {strides = array<i32>} : memref<1x1x128xf32, #tpu.memory_space<vmem>>, vector<1x1x128xf32>,
    return
  }
  func.func @transform_0(%arg0: i32) -> (i32, i32, i32) {
    %c0_i32 = arith.constant 0 : i32
    %c0_i32_0 = arith.constant 0 : i32
    %c0_i32_1 = arith.constant 0 : i32
    return %arg0, %c0_i32, %c0_i32_0 : i32, i32, i32
  }
  func.func @transform_1(%arg0: i32) -> (i32, i32) {
    %c0_i32 = arith.constant 0 : i32
    %c0_i32_0 = arith.constant 0 : i32
    %c0_i32_1 = arith.constant 0 : i32
    return %c0_i32, %c0_i32_0 : i32, i32
  }
  func.func @transform_2(%arg0: i32) -> (i32, i32) {
    %c0_i32 = arith.constant 0 : i32
    %c0_i32_0 = arith.constant 0 : i32
    %c0_i32_1 = arith.constant 0 : i32
    return %c0_i32, %c0_i32_0 : i32, i32
  }
  func.func @transform_3(%arg0: i32) -> (i32, i32, i32) {
    %c0_i32 = arith.constant 0 : i32
    %c0_i32_0 = arith.constant 0 : i32
    %c0_i32_1 = arith.constant 0 : i32
    %c0_i32_2 = arith.constant 0 : i32
    return %c0_i32, %c0_i32_0, %c0_i32_1 : i32, i32, i32
  }
  func.func @transform_4(%arg0: i32) -> (i32, i32, i32) {
    %c0_i32 = arith.constant 0 : i32
    %c0_i32_0 = arith.constant 0 : i32
    %c0_i32_1 = arith.constant 0 : i32
    return %arg0, %c0_i32, %c0_i32_0 : i32, i32, i32
  }
  func.func @transform_5(%arg0: i32) -> (i32, i32, i32) {
    %c0_i32 = arith.constant 0 : i32
    %c0_i32_0 = arith.constant 0 : i32
    %c0_i32_1 = arith.constant 0 : i32
    return %arg0, %c0_i32, %c0_i32_0 : i32, i32, i32
  }
}

</mosaic_0001>

<llo_original>
// kernel: no_model_forward.1
$region0: #{no_model_forward.1}
  #allocation0 [shape = 'u32[]', space=smem, size = 0x4, offset = 0x4, fixed_abs, tag = 'smem constant byte address 0x4 - core index']
  #allocation1 [shape = 'u32[72,128]{1,0:T(1,128)}', space=vmem, size = 0x9000, scoped, tag = 'internal scratch']
  %s0 = inlined_call_operand.hbm [shape: f32[1,16,16], index: 0, kind: input, shape index: {}]
  %s1 = inlined_call_operand.hbm [shape: f32[16,16], index: 1, kind: input, shape index: {}]
  %s2 = inlined_call_operand.vmem [shape: f32[1,128], index: 2, kind: input, shape index: {}]
  %s3 = inlined_call_operand.hbm [shape: f32[16,16,128], index: 3, kind: input, shape index: {}]
  %s4 = inlined_call_operand.hbm [shape: f32[1,16,16], index: 4, kind: output, shape index: {0}]
  %s5 = inlined_call_operand.vmem [shape: f32[1,1,128], index: 5, kind: output, shape index: {1}]
  %6 = xla_tuple %s4, %s5
  %s7 = sld [smem:[#allocation0]]
  $region46: #{no_model_forward.1} parent=0
    _
  %s9 = ssub.s32 1, %s7
  %s10 = scalar_select 0, %s9, %s7
  $region1: #{no_model_forward.1} parent=0
    #allocation2 [shape = 'u8[8192]{0}', space=vmem, size = 0x2000, scoped, tag = 'input window, operand 0, single buffered']
    #allocation3 [shape = 's32[1]{0}', space=sflag, size = 0x4, scoped, tag = 'scoped memory for no_model_forward.1']
    #allocation4 [shape = 's32[1]{0}', space=sflag, size = 0x4, scoped, tag = 'scoped memory for no_model_forward.1']
    #allocation5 [shape = 'u8[8192]{0}', space=vmem, size = 0x2000, scoped, tag = 'input window, operand 1, single buffered']
    #allocation6 [shape = 's32[1]{0}', space=sflag, size = 0x4, scoped, tag = 'scoped memory for no_model_forward.1']
    #allocation7 [shape = 'u8[131072]{0}', space=vmem, size = 0x20000, scoped, tag = 'input window, operand 3, single buffered']
    #allocation8 [shape = 'u8[8192]{0}', space=vmem, size = 0x2000, scoped, tag = 'output window, operand 0, single buffered']
    %11 = vsyncpa [#allocation3], 0
    %12 = vsyncpa [#allocation6], 0
    %13 = vsyncpa [#allocation4], 0
    // Predicated region
    $region2: #{no_model_forward.1} parent=1 // pred_check
      _
    $region3: #{no_model_forward.1} parent=1 // pred_check_branch
      %15 = sbr.rel (0) target = $region5
    $region4: #{no_model_forward.1} parent=1 // pred_region
      %17 = vsyncadd [#allocation3], 0
      %s18 = sshll.u32 %s0, 4
      %s19 = int_to_ptr.hbm [resolvable:$true] %s18
      %s20 = sshll.u32 [#allocation2], 4
      %s21 = int_to_ptr.vmem [resolvable:$true] %s20
      %26 = dma.hbm_to_vmem [thread:$0]  %s19, 256, %s21, [#allocation3], 128, 128, 8
    $region5: #{no_model_forward.1} parent=1 // pred_fallthru
      _
    // Predicated region
    $region6: #{no_model_forward.1} parent=1 // pred_check
      _
    $region7: #{no_model_forward.1} parent=1 // pred_check_branch
      %28 = sbr.rel (0) target = $region9
    $region8: #{no_model_forward.1} parent=1 // pred_region
      %30 = vsyncadd [#allocation6], 0
      %s31 = sshll.u32 %s1, 4
      %s32 = int_to_ptr.hbm [resolvable:$true] %s31
      %s33 = sshll.u32 [#allocation5], 4
      %s34 = int_to_ptr.vmem [resolvable:$true] %s33
      %39 = dma.hbm_to_vmem [thread:$0]  %s32, 256, %s34, [#allocation6], 128, 128, 8
    $region9: #{no_model_forward.1} parent=1 // pred_fallthru
      _
    // Predicated region
    $region10: #{no_model_forward.1} parent=1 // pred_check
      _
    $region11: #{no_model_forward.1} parent=1 // pred_check_branch
      %41 = sbr.rel (0) target = $region13
    $region12: #{no_model_forward.1} parent=1 // pred_region
      _
    $region13: #{no_model_forward.1} parent=1 // pred_fallthru
      _
    // Predicated region
    $region14: #{no_model_forward.1} parent=1 // pred_check
      _
    $region15: #{no_model_forward.1} parent=1 // pred_check_branch
      %43 = sbr.rel (0) target = $region17
    $region16: #{no_model_forward.1} parent=1 // pred_region
      %45 = vsyncadd [#allocation6], 0
      %s46 = sshll.u32 %s3, 4
      %s47 = int_to_ptr.hbm [resolvable:$true] %s46
      %s48 = sshll.u32 [#allocation7], 4
      %s49 = int_to_ptr.vmem [resolvable:$true] %s48
      %54 = dma.hbm_to_vmem [thread:$0]  %s47, 4096, %s49, [#allocation6], 128, 128, 8
    $region17: #{no_model_forward.1} parent=1 // pred_fallthru
      _
    // Predicated region
    $region18: #{no_model_forward.1} parent=1 // pred_check
      _
    $region19: #{no_model_forward.1} parent=1 // pred_check_branch
      %56 = sbr.rel (0) target = $region21
    $region20: #{no_model_forward.1} parent=1 // pred_region
      %58 = dma.done [#allocation3], 256
    $region21: #{no_model_forward.1} parent=1 // pred_fallthru
      _
    // Predicated region
    $region22: #{no_model_forward.1} parent=1 // pred_check
      _
    $region23: #{no_model_forward.1} parent=1 // pred_check_branch
      %60 = sbr.rel (0) target = $region25
    $region24: #{no_model_forward.1} parent=1 // pred_region
      %62 = dma.done [#allocation6], 256
    $region25: #{no_model_forward.1} parent=1 // pred_fallthru
      _
    // Predicated region
    $region26: #{no_model_forward.1} parent=1 // pred_check
      _
    $region27: #{no_model_forward.1} parent=1 // pred_check_branch
      %64 = sbr.rel (0) target = $region29
    $region28: #{no_model_forward.1} parent=1 // pred_region
      %66 = dma.done [#allocation6], 4096
    $region29: #{no_model_forward.1} parent=1 // pred_fallthru
      _
    %v67 = vld [vmem:[#allocation2] sm:$0xff]
    %v68 = vld [vmem:[#allocation2 + $0x8] sm:$0xff]
    %v69 = vxor.u32 %v67, 2147483648
    %v70 = vxor.u32 %v68, 2147483648
    %v71 = vmul.f32 %v69, 1.442695
    %v72 = vpow.pop %v71
    %v73 = vmul.f32 %v70, 1.442695
    %v74 = vpow.pop %v73
    %v75 = vadd.f32 %v72, 1.0
    %v76 = vadd.f32 %v74, 1.0
    %v77 = vrcp.pop %v75
    %v78 = vmul.f32 %v75, %v77
    %v79 = vsub.f32 1.0, %v78
    %v80 = vmul.f32 %v77, %v79
    %v81 = vadd.f32 %v77, %v80
    %vm82 = vweird.f32 %v75
    %vm83 = vweird.f32 %v77
    %vm84 = vmor %vm82, %vm83
    %v85 = vsel %vm84, %v77, %v81
    %v86 = vand.u32 2147483647, %v75
    %vm87 = vcmp.eq.f32.partialorder %v86, 8.507059e+37
    %v88 = vand.u32 %v75, 2147483648
    %v89 = vor.u32 1.1754944e-38, %v88
    %v90 = vsel %vm87, %v89, %v85
    %v91 = vmul.f32 1.0, %v90
    %v92 = vrcp.pop %v76
    %v93 = vmul.f32 %v76, %v92
    %v94 = vsub.f32 1.0, %v93
    %v95 = vmul.f32 %v92, %v94
    %v96 = vadd.f32 %v92, %v95
    %vm97 = vweird.f32 %v76
    %vm98 = vweird.f32 %v92
    %vm99 = vmor %vm97, %vm98
    %v100 = vsel %vm99, %v92, %v96
    %v101 = vand.u32 2147483647, %v76
    %vm102 = vcmp.eq.f32.partialorder %v101, 8.507059e+37
    %v103 = vand.u32 %v76, 2147483648
    %v104 = vor.u32 1.1754944e-38, %v103
    %v105 = vsel %vm102, %v104, %v100
    %v106 = vmul.f32 1.0, %v105
    %vm109 = vcmask 1046528
    %v110 = vrot.slane %v91, 1
    %v111 = vrot.slane %v106, 1
    %v112 = vsel %vm109, %v110, %v111
    %v114 = vrot.slane %v106, 7
    %v116 = vsel %vm109, %v111, %v114
    %vm118 = vcmask 1040384
    %v119 = vrot.slane %v91, 7
    %v120 = vsel %vm118, %v119, %v114
    %v122 = vsel %vm118, %v110, %v119
    %124 = vrot.lane.b32.xlu0 %v122, 127
    %v125 = vpop.permute.xlu0 %124
    %126 = vrot.lane.b32.xlu0 %v120, 127
    %v127 = vpop.permute.xlu0 %126
    %130 = vrot.lane.b32.xlu0 %v122, 1
    %v131 = vpop.permute.xlu0 %130
    %132 = vrot.lane.b32.xlu0 %v120, 1
    %v133 = vpop.permute.xlu0 %132
    %vm136 = vcmask 7168
    %v137 = vsel %vm136, %v125, %v131
    %v138 = vsel %vm136, %v127, %v133
    %vm139 = vcmask 121856
    %v140 = vsel %vm139, %v125, %v131
    %v141 = vsel %vm139, %v127, %v133
    %142 = vrot.lane.b32.xlu0 %v91, 127
    %v143 = vpop.permute.xlu0 %142
    %144 = vrot.lane.b32.xlu0 %v106, 127
    %v145 = vpop.permute.xlu0 %144
    %148 = vrot.lane.b32.xlu0 %v91, 1
    %v149 = vpop.permute.xlu0 %148
    %150 = vrot.lane.b32.xlu0 %v106, 1
    %v151 = vpop.permute.xlu0 %150
    %v154 = vsel %vm136, %v143, %v149
    %v155 = vsel %vm136, %v145, %v151
    %v156 = vsel %vm139, %v143, %v149
    %v157 = vsel %vm139, %v145, %v151
    %159 = vrot.lane.b32.xlu0 %v112, 127
    %v160 = vpop.permute.xlu0 %159
    %161 = vrot.lane.b32.xlu0 %v116, 127
    %v162 = vpop.permute.xlu0 %161
    %165 = vrot.lane.b32.xlu0 %v112, 1
    %v166 = vpop.permute.xlu0 %165
    %167 = vrot.lane.b32.xlu0 %v116, 1
    %v168 = vpop.permute.xlu0 %167
    %v171 = vsel %vm136, %v160, %v166
    %v172 = vsel %vm136, %v162, %v168
    %v173 = vsel %vm139, %v160, %v166
    %v174 = vsel %vm139, %v162, %v168
    %175 = vrot.lane.b32.xlu0 %v122, 16
    %v176 = vpop.permute.xlu0 %175
    %177 = vrot.lane.b32.xlu0 %v120, 16
    %v178 = vpop.permute.xlu0 %177
    %183 = vrot.lane.b32.xlu0 %v140, 32
    %v184 = vpop.permute.xlu0 %183
    %185 = vrot.lane.b32.xlu0 %v141, 32
    %v186 = vpop.permute.xlu0 %185
    %191 = vrot.lane.b32.xlu0 %v154, 48
    %v192 = vpop.permute.xlu0 %191
    %193 = vrot.lane.b32.xlu0 %v155, 48
    %v194 = vpop.permute.xlu0 %193
    %199 = vrot.lane.b32.xlu0 %v156, 64
    %v200 = vpop.permute.xlu0 %199
    %201 = vrot.lane.b32.xlu0 %v157, 64
    %v202 = vpop.permute.xlu0 %201
    %207 = vrot.lane.b32.xlu0 %v171, 80
    %v208 = vpop.permute.xlu0 %207
    %209 = vrot.lane.b32.xlu0 %v172, 80
    %v210 = vpop.permute.xlu0 %209
    %213 = vrot.lane.b32.xlu0 %v112, 96
    %v214 = vpop.permute.xlu0 %213
    %215 = vrot.lane.b32.xlu0 %v116, 96
    %v216 = vpop.permute.xlu0 %215
    %221 = vrot.lane.b32.xlu0 %v173, 112
    %v222 = vpop.permute.xlu0 %221
    %223 = vrot.lane.b32.xlu0 %v174, 112
    %v224 = vpop.permute.xlu0 %223
    %vm227 = vcmask 130048
    %v228 = vsel %vm227, %v137, %v176
    %v229 = vsel %vm227, %v138, %v178
    %vm230 = vcmask 261120
    %v231 = vsel %vm230, %v228, %v184
    %v232 = vsel %vm230, %v229, %v186
    %vm233 = vcmask 392192
    %v234 = vsel %vm233, %v231, %v192
    %v235 = vsel %vm233, %v232, %v194
    %vm236 = vcmask 523264
    %v237 = vsel %vm236, %v234, %v200
    %v238 = vsel %vm236, %v235, %v202
    %vm239 = vcmask 654336
    %v240 = vsel %vm239, %v237, %v208
    %v241 = vsel %vm239, %v238, %v210
    %vm242 = vcmask 785408
    %v243 = vsel %vm242, %v240, %v214
    %v244 = vsel %vm242, %v241, %v216
    %vm245 = vcmask 916480
    %v246 = vsel %vm245, %v243, %v222
    %v247 = vsel %vm245, %v244, %v224
    %248 = vrot.lane.b32.xlu0 %v91, 16
    %v249 = vpop.permute.xlu0 %248
    %250 = vrot.lane.b32.xlu0 %v106, 16
    %v251 = vpop.permute.xlu0 %250
    %254 = vrot.lane.b32.xlu0 %v91, 32
    %v255 = vpop.permute.xlu0 %254
    %256 = vrot.lane.b32.xlu0 %v106, 32
    %v257 = vpop.permute.xlu0 %256
    %260 = vrot.lane.b32.xlu0 %v91, 48
    %v261 = vpop.permute.xlu0 %260
    %262 = vrot.lane.b32.xlu0 %v106, 48
    %v263 = vpop.permute.xlu0 %262
    %266 = vrot.lane.b32.xlu0 %v91, 64
    %v267 = vpop.permute.xlu0 %266
    %268 = vrot.lane.b32.xlu0 %v106, 64
    %v269 = vpop.permute.xlu0 %268
    %272 = vrot.lane.b32.xlu0 %v91, 80
    %v273 = vpop.permute.xlu0 %272
    %274 = vrot.lane.b32.xlu0 %v106, 80
    %v275 = vpop.permute.xlu0 %274
    %278 = vrot.lane.b32.xlu0 %v91, 96
    %v279 = vpop.permute.xlu0 %278
    %280 = vrot.lane.b32.xlu0 %v106, 96
    %v281 = vpop.permute.xlu0 %280
    %284 = vrot.lane.b32.xlu0 %v91, 112
    %v285 = vpop.permute.xlu0 %284
    %286 = vrot.lane.b32.xlu0 %v106, 112
    %v287 = vpop.permute.xlu0 %286
    %v290 = vsel %vm227, %v91, %v249
    %v291 = vsel %vm227, %v106, %v251
    %v292 = vsel %vm230, %v290, %v255
    %v293 = vsel %vm230, %v291, %v257
    %v294 = vsel %vm233, %v292, %v261
    %v295 = vsel %vm233, %v293, %v263
    %v296 = vsel %vm236, %v294, %v267
    %v297 = vsel %vm236, %v295, %v269
    %v298 = vsel %vm239, %v296, %v273
    %v299 = vsel %vm239, %v297, %v275
    %v300 = vsel %vm242, %v298, %v279
    %v301 = vsel %vm242, %v299, %v281
    %v302 = vsel %vm245, %v300, %v285
    %v303 = vsel %vm245, %v301, %v287
    %v304 = vsub.f32 %v246, %v302
    %v305 = vsub.f32 %v247, %v303
    %v306 = vld [vmem:[%s2] sm:$0x1]
    %v307 = vmul.f32 %v304, %v304
    %v308 = vmul.f32 %v305, %v305
    %v309 = vmul.f32 %v307, -0.005
    %v310 = vmul.f32 %v308, -0.005
    %v311 = vmul.f32 %v309, 1.442695
    %v312 = vpow.pop %v311
    %v313 = vmul.f32 %v310, 1.442695
    %v314 = vpow.pop %v313
    %v316 = vperm.slane %v306, 0
    %v318 = vmul.f32 %v316, %v312
    %v319 = vmul.f32 %v316, %v314
    %v320 = vmul.f32 %v318, %v246
    %v321 = vmul.f32 %v319, %v247
    %322 = vrot.lane.b32.xlu0 %v320, 64
    %v323 = vpop.permute.xlu0 %322
    %324 = vrot.lane.b32.xlu0 %v321, 64
    %v325 = vpop.permute.xlu0 %324
    %v326 = vadd.f32 %v320, %v323
    %v327 = vadd.f32 %v321, %v325
    %328 = vrot.lane.b32.xlu0 %v326, 32
    %v329 = vpop.permute.xlu0 %328
    %330 = vrot.lane.b32.xlu0 %v327, 32
    %v331 = vpop.permute.xlu0 %330
    %v332 = vadd.f32 %v326, %v329
    %v333 = vadd.f32 %v327, %v331
    %334 = vrot.lane.b32.xlu0 %v332, 16
    %v335 = vpop.permute.xlu0 %334
    %336 = vrot.lane.b32.xlu0 %v333, 16
    %v337 = vpop.permute.xlu0 %336
    %v338 = vadd.f32 %v332, %v335
    %v339 = vadd.f32 %v333, %v337
    %v340 = vmul.f32 %v91, 0.20417996
    %v341 = vmul.f32 %v106, 0.20417996
    %v342 = vadd.f32 %v338, %v340
    %v343 = vadd.f32 %v339, %v341
    %344 = vrot.lane.b32.xlu0 %v318, 64
    %v345 = vpop.permute.xlu0 %344
    %346 = vrot.lane.b32.xlu0 %v319, 64
    %v347 = vpop.permute.xlu0 %346
    %v348 = vadd.f32 %v318, %v345
    %v349 = vadd.f32 %v319, %v347
    %350 = vrot.lane.b32.xlu0 %v348, 32
    %v351 = vpop.permute.xlu0 %350
    %352 = vrot.lane.b32.xlu0 %v349, 32
    %v353 = vpop.permute.xlu0 %352
    %v354 = vadd.f32 %v348, %v351
    %v355 = vadd.f32 %v349, %v353
    %356 = vrot.lane.b32.xlu0 %v354, 16
    %v357 = vpop.permute.xlu0 %356
    %358 = vrot.lane.b32.xlu0 %v355, 16
    %v359 = vpop.permute.xlu0 %358
    %v360 = vadd.f32 %v354, %v357
    %v361 = vadd.f32 %v355, %v359
    %v362 = vadd.f32 %v360, 0.20417996
    %v363 = vadd.f32 %v361, 0.20417996
    %v364 = vrcp.pop %v362
    %v365 = vrcp.pop %v363
    %v366 = vmul.f32 %v362, %v364
    %v367 = vmul.f32 %v363, %v365
    %v368 = vsub.f32 2.0, %v366
    %v369 = vsub.f32 2.0, %v367
    %v370 = vmul.f32 %v364, %v368
    %v371 = vmul.f32 %v365, %v369
    %v372 = vld [vmem:[#allocation5] sm:$0xff]
    %v373 = vld [vmem:[#allocation5 + $0x8] sm:$0xff]
    %v374 = vmul.f32 %v342, %v370
    %v375 = vmul.f32 %v343, %v371
    %v376 = vmul.f32 %v372, %v374
    %v377 = vmul.f32 %v373, %v375
    %378 = vst.msk [vmem:[#allocation8] sm:$0xff] %vm227, %v376
    %379 = vst.msk [vmem:[#allocation8 + $0x8] sm:$0xff] %vm227, %v377
    %v382 = vrot.slane %v376, 1
    %v383 = vrot.slane %v376, 2
    %v384 = vrot.slane %v376, 3
    %v385 = vrot.slane %v376, 4
    %v386 = vrot.slane %v376, 5
    %v387 = vrot.slane %v376, 6
    %v388 = vrot.slane %v376, 7
    %v389 = vrot.slane %v377, 1
    %v390 = vrot.slane %v377, 2
    %v391 = vrot.slane %v377, 3
    %v392 = vrot.slane %v377, 4
    %v393 = vrot.slane %v377, 5
    %v394 = vrot.slane %v377, 6
    %v395 = vrot.slane %v377, 7
    %v396 = vld [vmem:[#allocation7] sm:$0xff]
    %v397 = vld [vmem:[#allocation7 + $0x8] sm:$0xff]
    %v398 = vld [vmem:[#allocation7 + $0x10] sm:$0xff]
    %v399 = vld [vmem:[#allocation7 + $0x18] sm:$0xff]
    %v400 = vld [vmem:[#allocation7 + $0x20] sm:$0xff]
    %v401 = vld [vmem:[#allocation7 + $0x28] sm:$0xff]
    %v402 = vld [vmem:[#allocation7 + $0x30] sm:$0xff]
    %v403 = vld [vmem:[#allocation7 + $0x38] sm:$0xff]
    %v404 = vld [vmem:[#allocation7 + $0x40] sm:$0xff]
    %v405 = vld [vmem:[#allocation7 + $0x48] sm:$0xff]
    %v406 = vld [vmem:[#allocation7 + $0x50] sm:$0xff]
    %v407 = vld [vmem:[#allocation7 + $0x58] sm:$0xff]
    %v408 = vld [vmem:[#allocation7 + $0x60] sm:$0xff]
    %v409 = vld [vmem:[#allocation7 + $0x68] sm:$0xff]
    %v410 = vld [vmem:[#allocation7 + $0x70] sm:$0xff]
    %v411 = vld [vmem:[#allocation7 + $0x78] sm:$0xff]
    %v412 = vld [vmem:[#allocation7 + $0x80] sm:$0xff]
    %v413 = vld [vmem:[#allocation7 + $0x88] sm:$0xff]
    %v414 = vld [vmem:[#allocation7 + $0x90] sm:$0xff]
    %v415 = vld [vmem:[#allocation7 + $0x98] sm:$0xff]
    %v416 = vld [vmem:[#allocation7 + $0xa0] sm:$0xff]
    %v417 = vld [vmem:[#allocation7 + $0xa8] sm:$0xff]
    %v418 = vld [vmem:[#allocation7 + $0xb0] sm:$0xff]
    %v419 = vld [vmem:[#allocation7 + $0xb8] sm:$0xff]
    %v420 = vld [vmem:[#allocation7 + $0xc0] sm:$0xff]
    %v421 = vld [vmem:[#allocation7 + $0xc8] sm:$0xff]
    %v422 = vld [vmem:[#allocation7 + $0xd0] sm:$0xff]
    %v423 = vld [vmem:[#allocation7 + $0xd8] sm:$0xff]
    %v424 = vld [vmem:[#allocation7 + $0xe0] sm:$0xff]
    %v425 = vld [vmem:[#allocation7 + $0xe8] sm:$0xff]
    %v426 = vld [vmem:[#allocation7 + $0xf0] sm:$0xff]
    %v427 = vld [vmem:[#allocation7 + $0xf8] sm:$0xff]
    %v428 = vsel %vm227, %v376, 0
    %430 = vmatpush.msra.mxu0 0.0
    %431 = vmatpush.msra.mxu0 0.0
    %432 = vmatpush.msra.mxu0 0.0
    %433 = vmatpush.msra.mxu0 0.0
    %434 = vmatpush.msra.mxu0 0.0
    %435 = vmatpush.msra.mxu0 0.0
    %436 = vmatpush.msra.mxu0 0.0
    %437 = vmatpush.msra.mxu0 0.0
    %438 = vmatpush.msra.mxu0 0.0
    %439 = vmatpush.msra.mxu0 0.0
    %440 = vmatpush.msra.mxu0 0.0
    %441 = vmatpush.msra.mxu0 0.0
    %442 = vmatpush.msra.mxu0 0.0
    %443 = vmatpush.msra.mxu0 0.0
    %444 = vmatpush.msra.mxu0 %v397
    %445 = vmatpush.msra.mxu0 %v396
    %446 = vmatmul.f32.gmra.mxu0 %v428
    %v447 = vpop.f32.mrf.mxu0
    %v448 = vadd.f32 0.0, %v447
    %449 = vdwg.mxu0
    %v450 = vsel %vm227, %v382, 0
    %452 = vmatpush.msra.mxu0 0.0
    %453 = vmatpush.msra.mxu0 0.0
    %454 = vmatpush.msra.mxu0 0.0
    %455 = vmatpush.msra.mxu0 0.0
    %456 = vmatpush.msra.mxu0 0.0
    %457 = vmatpush.msra.mxu0 0.0
    %458 = vmatpush.msra.mxu0 0.0
    %459 = vmatpush.msra.mxu0 0.0
    %460 = vmatpush.msra.mxu0 0.0
    %461 = vmatpush.msra.mxu0 0.0
    %462 = vmatpush.msra.mxu0 0.0
    %463 = vmatpush.msra.mxu0 0.0
    %464 = vmatpush.msra.mxu0 0.0
    %465 = vmatpush.msra.mxu0 0.0
    %466 = vmatpush.msra.mxu0 %v399
    %467 = vmatpush.msra.mxu0 %v398
    %468 = vmatmul.f32.gmra.mxu0 %v450
    %v469 = vpop.f32.mrf.mxu0
    %v470 = vadd.f32 0.0, %v469
    %471 = vdwg.mxu0
    %v472 = vsel %vm227, %v383, 0
    %474 = vmatpush.msra.mxu0 0.0
    %475 = vmatpush.msra.mxu0 0.0
    %476 = vmatpush.msra.mxu0 0.0
    %477 = vmatpush.msra.mxu0 0.0
    %478 = vmatpush.msra.mxu0 0.0
    %479 = vmatpush.msra.mxu0 0.0
    %480 = vmatpush.msra.mxu0 0.0
    %481 = vmatpush.msra.mxu0 0.0
    %482 = vmatpush.msra.mxu0 0.0
    %483 = vmatpush.msra.mxu0 0.0
    %484 = vmatpush.msra.mxu0 0.0
    %485 = vmatpush.msra.mxu0 0.0
    %486 = vmatpush.msra.mxu0 0.0
    %487 = vmatpush.msra.mxu0 0.0
    %488 = vmatpush.msra.mxu0 %v401
    %489 = vmatpush.msra.mxu0 %v400
    %490 = vmatmul.f32.gmra.mxu0 %v472
    %v491 = vpop.f32.mrf.mxu0
    %v492 = vadd.f32 0.0, %v491
    %493 = vdwg.mxu0
    %v494 = vsel %vm227, %v384, 0
    %496 = vmatpush.msra.mxu0 0.0
    %497 = vmatpush.msra.mxu0 0.0
    %498 = vmatpush.msra.mxu0 0.0
    %499 = vmatpush.msra.mxu0 0.0
    %500 = vmatpush.msra.mxu0 0.0
    %501 = vmatpush.msra.mxu0 0.0
    %502 = vmatpush.msra.mxu0 0.0
    %503 = vmatpush.msra.mxu0 0.0
    %504 = vmatpush.msra.mxu0 0.0
    %505 = vmatpush.msra.mxu0 0.0
    %506 = vmatpush.msra.mxu0 0.0
    %507 = vmatpush.msra.mxu0 0.0
    %508 = vmatpush.msra.mxu0 0.0
    %509 = vmatpush.msra.mxu0 0.0
    %510 = vmatpush.msra.mxu0 %v403
    %511 = vmatpush.msra.mxu0 %v402
    %512 = vmatmul.f32.gmra.mxu0 %v494
    %v513 = vpop.f32.mrf.mxu0
    %v514 = vadd.f32 0.0, %v513
    %515 = vdwg.mxu0
    %v516 = vsel %vm227, %v385, 0
    %518 = vmatpush.msra.mxu0 0.0
    %519 = vmatpush.msra.mxu0 0.0
    %520 = vmatpush.msra.mxu0 0.0
    %521 = vmatpush.msra.mxu0 0.0
    %522 = vmatpush.msra.mxu0 0.0
    %523 = vmatpush.msra.mxu0 0.0
    %524 = vmatpush.msra.mxu0 0.0
    %525 = vmatpush.msra.mxu0 0.0
    %526 = vmatpush.msra.mxu0 0.0
    %527 = vmatpush.msra.mxu0 0.0
    %528 = vmatpush.msra.mxu0 0.0
    %529 = vmatpush.msra.mxu0 0.0
    %530 = vmatpush.msra.mxu0 0.0
    %531 = vmatpush.msra.mxu0 0.0
    %532 = vmatpush.msra.mxu0 %v405
    %533 = vmatpush.msra.mxu0 %v404
    %534 = vmatmul.f32.gmra.mxu0 %v516
    %v535 = vpop.f32.mrf.mxu0
    %v536 = vadd.f32 0.0, %v535
    %537 = vdwg.mxu0
    %v538 = vsel %vm227, %v386, 0
    %540 = vmatpush.msra.mxu0 0.0
    %541 = vmatpush.msra.mxu0 0.0
    %542 = vmatpush.msra.mxu0 0.0
    %543 = vmatpush.msra.mxu0 0.0
    %544 = vmatpush.msra.mxu0 0.0
    %545 = vmatpush.msra.mxu0 0.0
    %546 = vmatpush.msra.mxu0 0.0
    %547 = vmatpush.msra.mxu0 0.0
    %548 = vmatpush.msra.mxu0 0.0
    %549 = vmatpush.msra.mxu0 0.0
    %550 = vmatpush.msra.mxu0 0.0
    %551 = vmatpush.msra.mxu0 0.0
    %552 = vmatpush.msra.mxu0 0.0
    %553 = vmatpush.msra.mxu0 0.0
    %554 = vmatpush.msra.mxu0 %v407
    %555 = vmatpush.msra.mxu0 %v406
    %556 = vmatmul.f32.gmra.mxu0 %v538
    %v557 = vpop.f32.mrf.mxu0
    %v558 = vadd.f32 0.0, %v557
    %559 = vdwg.mxu0
    %v560 = vsel %vm227, %v387, 0
    %562 = vmatpush.msra.mxu0 0.0
    %563 = vmatpush.msra.mxu0 0.0
    %564 = vmatpush.msra.mxu0 0.0
    %565 = vmatpush.msra.mxu0 0.0
    %566 = vmatpush.msra.mxu0 0.0
    %567 = vmatpush.msra.mxu0 0.0
    %568 = vmatpush.msra.mxu0 0.0
    %569 = vmatpush.msra.mxu0 0.0
    %570 = vmatpush.msra.mxu0 0.0
    %571 = vmatpush.msra.mxu0 0.0
    %572 = vmatpush.msra.mxu0 0.0
    %573 = vmatpush.msra.mxu0 0.0
    %574 = vmatpush.msra.mxu0 0.0
    %575 = vmatpush.msra.mxu0 0.0
    %576 = vmatpush.msra.mxu0 %v409
    %577 = vmatpush.msra.mxu0 %v408
    %578 = vmatmul.f32.gmra.mxu0 %v560
    %v579 = vpop.f32.mrf.mxu0
    %v580 = vadd.f32 0.0, %v579
    %581 = vdwg.mxu0
    %v582 = vsel %vm227, %v388, 0
    %584 = vmatpush.msra.mxu0 0.0
    %585 = vmatpush.msra.mxu0 0.0
    %586 = vmatpush.msra.mxu0 0.0
    %587 = vmatpush.msra.mxu0 0.0
    %588 = vmatpush.msra.mxu0 0.0
    %589 = vmatpush.msra.mxu0 0.0
    %590 = vmatpush.msra.mxu0 0.0
    %591 = vmatpush.msra.mxu0 0.0
    %592 = vmatpush.msra.mxu0 0.0
    %593 = vmatpush.msra.mxu0 0.0
    %594 = vmatpush.msra.mxu0 0.0
    %595 = vmatpush.msra.mxu0 0.0
    %596 = vmatpush.msra.mxu0 0.0
    %597 = vmatpush.msra.mxu0 0.0
    %598 = vmatpush.msra.mxu0 %v411
    %599 = vmatpush.msra.mxu0 %v410
    %600 = vmatmul.f32.gmra.mxu0 %v582
    %v601 = vpop.f32.mrf.mxu0
    %v602 = vadd.f32 0.0, %v601
    %603 = vdwg.mxu0
    %v604 = vsel %vm227, %v377, 0
    %606 = vmatpush.msra.mxu0 0.0
    %607 = vmatpush.msra.mxu0 0.0
    %608 = vmatpush.msra.mxu0 0.0
    %609 = vmatpush.msra.mxu0 0.0
    %610 = vmatpush.msra.mxu0 0.0
    %611 = vmatpush.msra.mxu0 0.0
    %612 = vmatpush.msra.mxu0 0.0
    %613 = vmatpush.msra.mxu0 0.0
    %614 = vmatpush.msra.mxu0 0.0
    %615 = vmatpush.msra.mxu0 0.0
    %616 = vmatpush.msra.mxu0 0.0
    %617 = vmatpush.msra.mxu0 0.0
    %618 = vmatpush.msra.mxu0 0.0
    %619 = vmatpush.msra.mxu0 0.0
    %620 = vmatpush.msra.mxu0 %v413
    %621 = vmatpush.msra.mxu0 %v412
    %622 = vmatmul.f32.gmra.mxu0 %v604
    %v623 = vpop.f32.mrf.mxu0
    %v624 = vadd.f32 0.0, %v623
    %625 = vdwg.mxu0
    %v626 = vsel %vm227, %v389, 0
    %628 = vmatpush.msra.mxu0 0.0
    %629 = vmatpush.msra.mxu0 0.0
    %630 = vmatpush.msra.mxu0 0.0
    %631 = vmatpush.msra.mxu0 0.0
    %632 = vmatpush.msra.mxu0 0.0
    %633 = vmatpush.msra.mxu0 0.0
    %634 = vmatpush.msra.mxu0 0.0
    %635 = vmatpush.msra.mxu0 0.0
    %636 = vmatpush.msra.mxu0 0.0
    %637 = vmatpush.msra.mxu0 0.0
    %638 = vmatpush.msra.mxu0 0.0
    %639 = vmatpush.msra.mxu0 0.0
    %640 = vmatpush.msra.mxu0 0.0
    %641 = vmatpush.msra.mxu0 0.0
    %642 = vmatpush.msra.mxu0 %v415
    %643 = vmatpush.msra.mxu0 %v414
    %644 = vmatmul.f32.gmra.mxu0 %v626
    %v645 = vpop.f32.mrf.mxu0
    %v646 = vadd.f32 0.0, %v645
    %647 = vdwg.mxu0
    %v648 = vsel %vm227, %v390, 0
    %650 = vmatpush.msra.mxu0 0.0
    %651 = vmatpush.msra.mxu0 0.0
    %652 = vmatpush.msra.mxu0 0.0
    %653 = vmatpush.msra.mxu0 0.0
    %654 = vmatpush.msra.mxu0 0.0
    %655 = vmatpush.msra.mxu0 0.0
    %656 = vmatpush.msra.mxu0 0.0
    %657 = vmatpush.msra.mxu0 0.0
    %658 = vmatpush.msra.mxu0 0.0
    %659 = vmatpush.msra.mxu0 0.0
    %660 = vmatpush.msra.mxu0 0.0
    %661 = vmatpush.msra.mxu0 0.0
    %662 = vmatpush.msra.mxu0 0.0
    %663 = vmatpush.msra.mxu0 0.0
    %664 = vmatpush.msra.mxu0 %v417
    %665 = vmatpush.msra.mxu0 %v416
    %666 = vmatmul.f32.gmra.mxu0 %v648
    %v667 = vpop.f32.mrf.mxu0
    %v668 = vadd.f32 0.0, %v667
    %669 = vdwg.mxu0
    %v670 = vsel %vm227, %v391, 0
    %672 = vmatpush.msra.mxu0 0.0
    %673 = vmatpush.msra.mxu0 0.0
    %674 = vmatpush.msra.mxu0 0.0
    %675 = vmatpush.msra.mxu0 0.0
    %676 = vmatpush.msra.mxu0 0.0
    %677 = vmatpush.msra.mxu0 0.0
    %678 = vmatpush.msra.mxu0 0.0
    %679 = vmatpush.msra.mxu0 0.0
    %680 = vmatpush.msra.mxu0 0.0
    %681 = vmatpush.msra.mxu0 0.0
    %682 = vmatpush.msra.mxu0 0.0
    %683 = vmatpush.msra.mxu0 0.0
    %684 = vmatpush.msra.mxu0 0.0
    %685 = vmatpush.msra.mxu0 0.0
    %686 = vmatpush.msra.mxu0 %v419
    %687 = vmatpush.msra.mxu0 %v418
    %688 = vmatmul.f32.gmra.mxu0 %v670
    %v689 = vpop.f32.mrf.mxu0
    %v690 = vadd.f32 0.0, %v689
    %691 = vdwg.mxu0
    %v692 = vsel %vm227, %v392, 0
    %694 = vmatpush.msra.mxu0 0.0
    %695 = vmatpush.msra.mxu0 0.0
    %696 = vmatpush.msra.mxu0 0.0
    %697 = vmatpush.msra.mxu0 0.0
    %698 = vmatpush.msra.mxu0 0.0
    %699 = vmatpush.msra.mxu0 0.0
    %700 = vmatpush.msra.mxu0 0.0
    %701 = vmatpush.msra.mxu0 0.0
    %702 = vmatpush.msra.mxu0 0.0
    %703 = vmatpush.msra.mxu0 0.0
    %704 = vmatpush.msra.mxu0 0.0
    %705 = vmatpush.msra.mxu0 0.0
    %706 = vmatpush.msra.mxu0 0.0
    %707 = vmatpush.msra.mxu0 0.0
    %708 = vmatpush.msra.mxu0 %v421
    %709 = vmatpush.msra.mxu0 %v420
    %710 = vmatmul.f32.gmra.mxu0 %v692
    %v711 = vpop.f32.mrf.mxu0
    %v712 = vadd.f32 0.0, %v711
    %713 = vdwg.mxu0
    %v714 = vsel %vm227, %v393, 0
    %716 = vmatpush.msra.mxu0 0.0
    %717 = vmatpush.msra.mxu0 0.0
    %718 = vmatpush.msra.mxu0 0.0
    %719 = vmatpush.msra.mxu0 0.0
    %720 = vmatpush.msra.mxu0 0.0
    %721 = vmatpush.msra.mxu0 0.0
    %722 = vmatpush.msra.mxu0 0.0
    %723 = vmatpush.msra.mxu0 0.0
    %724 = vmatpush.msra.mxu0 0.0
    %725 = vmatpush.msra.mxu0 0.0
    %726 = vmatpush.msra.mxu0 0.0
    %727 = vmatpush.msra.mxu0 0.0
    %728 = vmatpush.msra.mxu0 0.0
    %729 = vmatpush.msra.mxu0 0.0
    %730 = vmatpush.msra.mxu0 %v423
    %731 = vmatpush.msra.mxu0 %v422
    %732 = vmatmul.f32.gmra.mxu0 %v714
    %v733 = vpop.f32.mrf.mxu0
    %v734 = vadd.f32 0.0, %v733
    %735 = vdwg.mxu0
    %v736 = vsel %vm227, %v394, 0
    %738 = vmatpush.msra.mxu0 0.0
    %739 = vmatpush.msra.mxu0 0.0
    %740 = vmatpush.msra.mxu0 0.0
    %741 = vmatpush.msra.mxu0 0.0
    %742 = vmatpush.msra.mxu0 0.0
    %743 = vmatpush.msra.mxu0 0.0
    %744 = vmatpush.msra.mxu0 0.0
    %745 = vmatpush.msra.mxu0 0.0
    %746 = vmatpush.msra.mxu0 0.0
    %747 = vmatpush.msra.mxu0 0.0
    %748 = vmatpush.msra.mxu0 0.0
    %749 = vmatpush.msra.mxu0 0.0
    %750 = vmatpush.msra.mxu0 0.0
    %751 = vmatpush.msra.mxu0 0.0
    %752 = vmatpush.msra.mxu0 %v425
    %753 = vmatpush.msra.mxu0 %v424
    %754 = vmatmul.f32.gmra.mxu0 %v736
    %v755 = vpop.f32.mrf.mxu0
    %v756 = vadd.f32 0.0, %v755
    %757 = vdwg.mxu0
    %v758 = vsel %vm227, %v395, 0
    %760 = vmatpush.msra.mxu0 0.0
    %761 = vmatpush.msra.mxu0 0.0
    %762 = vmatpush.msra.mxu0 0.0
    %763 = vmatpush.msra.mxu0 0.0
    %764 = vmatpush.msra.mxu0 0.0
    %765 = vmatpush.msra.mxu0 0.0
    %766 = vmatpush.msra.mxu0 0.0
    %767 = vmatpush.msra.mxu0 0.0
    %768 = vmatpush.msra.mxu0 0.0
    %769 = vmatpush.msra.mxu0 0.0
    %770 = vmatpush.msra.mxu0 0.0
    %771 = vmatpush.msra.mxu0 0.0
    %772 = vmatpush.msra.mxu0 0.0
    %773 = vmatpush.msra.mxu0 0.0
    %774 = vmatpush.msra.mxu0 %v427
    %775 = vmatpush.msra.mxu0 %v426
    %776 = vmatmul.f32.gmra.mxu0 %v758
    %v777 = vpop.f32.mrf.mxu0
    %v778 = vadd.f32 0.0, %v777
    %779 = vdwg.mxu0
    %v780 = vsel %vm118, %v448, 0.0
    %v781 = vsel %vm118, %v470, 0.0
    %v782 = vadd.f32 %v780, %v781
    %v783 = vsel %vm118, %v492, 0.0
    %v784 = vadd.f32 %v782, %v783
    %v785 = vsel %vm118, %v514, 0.0
    %v786 = vadd.f32 %v784, %v785
    %v787 = vsel %vm118, %v536, 0.0
    %v788 = vadd.f32 %v786, %v787
    %v789 = vsel %vm118, %v558, 0.0
    %v790 = vadd.f32 %v788, %v789
    %v791 = vsel %vm118, %v580, 0.0
    %v792 = vadd.f32 %v790, %v791
    %v793 = vsel %vm118, %v602, 0.0
    %v794 = vadd.f32 %v792, %v793
    %v795 = vsel %vm118, %v624, 0.0
    %v796 = vadd.f32 %v794, %v795
    %v797 = vsel %vm118, %v646, 0.0
    %v798 = vadd.f32 %v796, %v797
    %v799 = vsel %vm118, %v668, 0.0
    %v800 = vadd.f32 %v798, %v799
    %v801 = vsel %vm118, %v690, 0.0
    %v802 = vadd.f32 %v800, %v801
    %v803 = vsel %vm118, %v712, 0.0
    %v804 = vadd.f32 %v802, %v803
    %v805 = vsel %vm118, %v734, 0.0
    %v806 = vadd.f32 %v804, %v805
    %v807 = vsel %vm118, %v756, 0.0
    %v808 = vadd.f32 %v806, %v807
    %v809 = vsel %vm118, %v778, 0.0
    %v810 = vadd.f32 %v808, %v809
    %811 = vst [vmem:[%s5] sm:$0x1] %v810
    // Predicated region
    $region30: #{no_model_forward.1} parent=1 // pred_check
      _
    $region31: #{no_model_forward.1} parent=1 // pred_check_branch
      %813 = sbr.rel (0) target = $region33
    $region32: #{no_model_forward.1} parent=1 // pred_region
      %815 = vsyncadd [#allocation4], 0
      %s816 = sshll.u32 [#allocation8], 4
      %s817 = int_to_ptr.vmem [resolvable:$true] %s816
      %s818 = sshll.u32 %s4, 4
      %s819 = int_to_ptr.hbm [resolvable:$true] %s818
      %824 = dma.vmem_to_hbm [thread:$0]  %s817, 256, %s819, [#allocation4], 128, 128, 8
    $region33: #{no_model_forward.1} parent=1 // pred_fallthru
      _
    // Predicated region
    $region34: #{no_model_forward.1} parent=1 // pred_check
      _
    $region35: #{no_model_forward.1} parent=1 // pred_check_branch
      %826 = sbr.rel (0) target = $region37
    $region36: #{no_model_forward.1} parent=1 // pred_region
      _
    $region37: #{no_model_forward.1} parent=1 // pred_fallthru
      _
    // Predicated region
    $region38: #{no_model_forward.1} parent=1 // pred_check
      _
    $region39: #{no_model_forward.1} parent=1 // pred_check_branch
      %828 = sbr.rel (0) target = $region41
    $region40: #{no_model_forward.1} parent=1 // pred_region
      %830 = dma.done [#allocation4], 256
    $region41: #{no_model_forward.1} parent=1 // pred_fallthru
      _
    // Predicated region
    $region42: #{no_model_forward.1} parent=1 // pred_check
      _
    $region43: #{no_model_forward.1} parent=1 // pred_check_branch
      %832 = sbr.rel (0) target = $region45
    $region44: #{no_model_forward.1} parent=1 // pred_region
      _
    $region45: #{no_model_forward.1} parent=1 // pred_fallthru
      _
    %833 = vsyncpa [#allocation3], 1
    %834 = vsyncpa [#allocation6], 1
    %835 = vsyncpa [#allocation4], 1

</llo_original>
